<compile_context>
chip_gen: v5e
topology: v5e:2x2
jax: 0.10.0
libtpu: 0.0.40
codegen_flags: <defaults>
</compile_context>

<pallas_src>
import functools
import math

import jax
import jax.numpy as jnp
from jax import lax
from jax.experimental import pallas as pl
from jax.experimental.pallas import tpu as pltpu

# ------------------------- small synthetic configuration -------------------------
HIDDEN_SIZE = 64
NUM_HEADS = 2
Q_LORA_RANK = 32
QK_ROPE_HEAD_DIM = 16
KV_LORA_RANK = 128          # plays the role of head_dim_v=512 in the real model
V_HEAD_DIM = 32
QK_NOPE_HEAD_DIM = 32
MAX_POSITION_EMBEDDINGS = 2048
Q_HEAD_DIM = QK_NOPE_HEAD_DIM + QK_ROPE_HEAD_DIM          # 48
QK_HEAD_DIM = KV_LORA_RANK + QK_ROPE_HEAD_DIM             # 144 (latent attn dim)
DTYPE = jnp.float32
ATTN_DTYPE = jnp.bfloat16   # streaming dtype for the attention operands
RMS_EPS = 1e-6
ROPE_BASE = 10000.0
NEG_INF = -1e30             # finite mask value (avoids exp(-inf - -inf) NaNs)
DEFAULT_BLOCK_KV = 2048


def _round_up(x, m):
    return ((x + m - 1) // m) * m


# ------------------------------ Pallas MLA attention ------------------------------
def _mla_flash_kernel(limit_ref, qlat_ref, qpe_ref, klat_ref, kpet_ref,
                      acc_out_ref, m_out_ref, l_out_ref,
                      m_sc, l_sc, acc_sc, *,
                      scale, block_kv, kv_len, q_len, tiles_per_split):
    """One (batch, kv_split, kv_tile) grid step.

    limit_ref : (HQ, 1) int32   per-row causal limit (kv_len - q_len + q_pos)
    qlat_ref  : (HQ, rank) bf16 latent query (heads folded into rows)
    qpe_ref   : (HQ, rope) bf16 rope query
    klat_ref  : (tk, rank) bf16 latent keys == values
    kpet_ref  : (rope, tk) bf16 rope keys, pre-transposed (K on lanes)
    outputs   : per-split un-normalized acc / running max / running denom
    m/l/acc scratch : online-softmax state (f32 VMEM, persists over kv tiles)
    """
    si = pl.program_id(1)
    ki = pl.program_id(2)

    @pl.when(ki == 0)
    def _init():
        m_sc[...] = jnp.full_like(m_sc, NEG_INF)
        l_sc[...] = jnp.zeros_like(l_sc)
        acc_sc[...] = jnp.zeros_like(acc_sc)

    q_lat = qlat_ref[...]
    q_pe = qpe_ref[...]
    k_lat = klat_ref[...]
    k_pe_t = kpet_ref[...]

    # scores = (q_lat @ k_lat^T + q_pe @ k_pe_t) * scale ; f32 accumulation on MXU
    s = lax.dot_general(q_lat, k_lat, (((1,), (1,)), ((), ())),
                        preferred_element_type=jnp.float32)
    s = s + lax.dot_general(q_pe, k_pe_t, (((1,), (0,)), ((), ())),
                            preferred_element_type=jnp.float32)
    s = s * scale

    # absolute first column of this KV tile
    col0 = (si * tiles_per_split + ki) * block_kv
    # tile needs masking only if it crosses the smallest causal limit
    # (kv_len - q_len); the zero-padded tail is always past that limit.
    needs_mask = (col0 + (block_kv - 1)) > (kv_len - q_len)

    m_prev = m_sc[...]

    def update(allowed):
        if allowed is None:
            s_m = s
        else:
            s_m = jnp.where(allowed, s, NEG_INF)
        m_new = jnp.maximum(m_prev, jnp.max(s_m, axis=-1, keepdims=True))
        alpha = jnp.exp(m_prev - m_new)
        p = jnp.exp(s_m - m_new)
        if allowed is not None:
            # explicit zeroing => fully-masked tiles contribute exactly 0
            p = jnp.where(allowed, p, 0.0)
        l_sc[...] = alpha * l_sc[...] + jnp.sum(p, axis=-1, keepdims=True)
        acc_sc[...] = alpha * acc_sc[...] + lax.dot_general(
            p.astype(k_lat.dtype), k_lat, (((1,), (0,)), ((), ())),
            preferred_element_type=jnp.float32)
        m_sc[...] = m_new

    @pl.when(needs_mask)
    def _boundary_tile():
        cols = col0 + lax.broadcasted_iota(jnp.int32, s.shape, 1)
        update(cols <= limit_ref[...])

    @pl.when(jnp.logical_not(needs_mask))
    def _interior_tile():
        update(None)

    @pl.when(ki == pl.num_programs(2) - 1)
    def _finalize():
        acc_out_ref[...] = acc_sc[...]
        m_out_ref[...] = m_sc[...]
        l_out_ref[...] = l_sc[...]


def prepare_kv_cache(compressed_kv, *, block_kv=DEFAULT_BLOCK_KV, num_kv_splits=1):
    """One-time repack of the MLA latent KV cache into the kernel layout.

    In a real decode loop this runs when the cache is allocated / appended to,
    NOT per attention call: the cache is kept persistently as two contiguous
    bf16 arrays (latent [b, kv_pad, rank] and transposed rope [b, rope, kv_pad]),
    pre-padded to the KV-tile multiple, so the per-step pallas_call streams the
    cache through HBM exactly once with no astype / slice / pad on the hot path.
    """
    b, kv_len, d = compressed_kv.shape
    rank = KV_LORA_RANK
    rope = d - rank

    tk = min(block_kv, _round_up(kv_len, 128))
    tiles = pl.cdiv(kv_len, tk)
    tiles_per_split = pl.cdiv(tiles, num_kv_splits)
    kv_pad = num_kv_splits * tiles_per_split * tk

    k_bf = compressed_kv.astype(ATTN_DTYPE)
    k_lat = k_bf[..., :rank]                             # [b, kv, rank]
    k_pe_t = jnp.swapaxes(k_bf[..., rank:], 1, 2)        # [b, rope, kv]
    if kv_pad != kv_len:
        pad = kv_pad - kv_len
        k_lat = jnp.pad(k_lat, ((0, 0), (0, pad), (0, 0)))
        k_pe_t = jnp.pad(k_pe_t, ((0, 0), (0, 0), (0, pad)))
    return k_lat, k_pe_t, kv_len, tk, tiles_per_split


def mla_flash_decode(query_states, k_lat, k_pe_t, kv_len, scale, *,
                     block_kv, tiles_per_split, num_kv_splits):
    """query_states: [b, H, q_len, D]; prepared cache arrays -> [b, H, q_len, rank]."""
    b, h, q_len, d = query_states.shape
    rank = KV_LORA_RANK
    rope = d - rank
    hq = h * q_len                       # heads folded into matmul rows
    hq_pad = _round_up(max(hq, 16), 16)  # bf16 sublane tile = 16

    # q-side prep is tiny (hq x 144) -> negligible per-step work
    q_bf = query_states.astype(ATTN_DTYPE).reshape(b, hq, d)     # h-major rows
    if hq_pad != hq:
        q_bf = jnp.pad(q_bf, ((0, 0), (0, hq_pad - hq), (0, 0)))
    q_lat = q_bf[..., :rank]
    q_pe = q_bf[..., rank:]

    # per-row causal limit (rows are h-major: row = h*q_len + qi); padded rows
    # get the minimum limit (their outputs are discarded anyway).
    q_pos = jnp.tile(jnp.arange(q_len, dtype=jnp.int32), h)
    row_limit = jnp.full((hq_pad, 1), kv_len - q_len, dtype=jnp.int32)
    row_limit = row_limit.at[:hq, 0].set(kv_len - q_len + q_pos)

    kernel = functools.partial(
        _mla_flash_kernel, scale=scale, block_kv=block_kv, kv_len=kv_len,
        q_len=q_len, tiles_per_split=tiles_per_split)

    acc_p, m_p, l_p = pl.pallas_call(
        kernel,
        out_shape=(
            jax.ShapeDtypeStruct((b, num_kv_splits, hq_pad, rank), jnp.float32),
            jax.ShapeDtypeStruct((b, num_kv_splits, hq_pad, 1), jnp.float32),
            jax.ShapeDtypeStruct((b, num_kv_splits, hq_pad, 1), jnp.float32),
        ),
        grid_spec=pltpu.PrefetchScalarGridSpec(
            num_scalar_prefetch=0,
            grid=(b, num_kv_splits, tiles_per_split),
            in_specs=[
                # grid-invariant: stays resident, no re-DMA across kv steps
                pl.BlockSpec((hq_pad, 1), lambda bi, si, ki: (0, 0)),
                pl.BlockSpec((None, hq_pad, rank), lambda bi, si, ki: (bi, 0, 0)),
                pl.BlockSpec((None, hq_pad, rope), lambda bi, si, ki: (bi, 0, 0)),
                pl.BlockSpec((None, block_kv, rank),
                             lambda bi, si, ki: (bi, si * tiles_per_split + ki, 0)),
                pl.BlockSpec((None, rope, block_kv),
                             lambda bi, si, ki: (bi, 0, si * tiles_per_split + ki)),
            ],
            out_specs=(
                pl.BlockSpec((None, None, hq_pad, rank),
                             lambda bi, si, ki: (bi, si, 0, 0)),
                pl.BlockSpec((None, None, hq_pad, 1),
                             lambda bi, si, ki: (bi, si, 0, 0)),
                pl.BlockSpec((None, None, hq_pad, 1),
                             lambda bi, si, ki: (bi, si, 0, 0)),
            ),
            scratch_shapes=[
                pltpu.VMEM((hq_pad, 1), jnp.float32),     # running max
                pltpu.VMEM((hq_pad, 1), jnp.float32),     # running denom
                pltpu.VMEM((hq_pad, rank), jnp.float32),  # running P@V accumulator
            ],
        ),
        compiler_params=pltpu.CompilerParams(
            dimension_semantics=("parallel", "parallel", "arbitrary"),
            vmem_limit_bytes=32 * 1024 * 1024,
        ),
    )(row_limit, q_lat, q_pe, k_lat, k_pe_t)

    # flash-decoding combine across KV splits (tiny: [b, S, hq, rank] f32)
    m_glob = jnp.max(m_p, axis=1, keepdims=True)
    w = jnp.exp(m_p - m_glob)
    l_glob = jnp.sum(w * l_p, axis=1)                    # [b, hq_pad, 1]
    acc_glob = jnp.sum(w * acc_p, axis=1)                # [b, hq_pad, rank]
    out = acc_glob / jnp.maximum(l_glob, 1e-30)
    out = out[:, :hq, :].astype(query_states.dtype)
    return out.reshape(b, h, q_len, rank)


def mla_attention_pallas(query_states, keys, scale, *,
                         block_kv=DEFAULT_BLOCK_KV, num_kv_splits=None):
    b, h, q_len, d = query_states.shape
    kv_len = keys.shape[1]
    if kv_len < q_len:
        raise ValueError(f"kv_len ({kv_len}) must be >= q_len ({q_len}) for "
                         "right-aligned causal MLA decode")
    if num_kv_splits is None:
        # TODO(synk): only v7x has 2 TensorCores; split-KV helps there for b=1.
        tk_est = min(block_kv, _round_up(kv_len, 128))
        num_kv_splits = 2 if (b == 1 and pl.cdiv(kv_len, tk_est) >= 2) else 1
    k_lat, k_pe_t, kv_len, tk, tiles_per_split = prepare_kv_cache(
        keys, block_kv=block_kv, num_kv_splits=num_kv_splits)
    return mla_flash_decode(query_states, k_lat, k_pe_t, kv_len, scale,
                            block_kv=tk, tiles_per_split=tiles_per_split,
                            num_kv_splits=num_kv_splits)


# ------------------------------ pure-JAX reference attention ------------------------------
def mla_attention_reference(query_states, keys, scale):
    b, h, q_len, d = query_states.shape
    kv_len = keys.shape[1]
    q = query_states.astype(ATTN_DTYPE)
    k = keys.astype(ATTN_DTYPE)
    s = jnp.einsum('bhqd,bkd->bhqk', q, k,
                   preferred_element_type=jnp.float32) * scale
    qi = jnp.arange(q_len)[:, None]
    kj = jnp.arange(kv_len)[None, :]
    mask = kj <= (kv_len - q_len + qi)
    s = jnp.where(mask, s, NEG_INF)
    m = jnp.max(s, axis=-1, keepdims=True)
    p = jnp.exp(s - m)
    l = jnp.sum(p, axis=-1, keepdims=True)
    v = k[..., :KV_LORA_RANK]
    out = jnp.einsum('bhqk,bkc->bhqc', p.astype(ATTN_DTYPE), v,
                     preferred_element_type=jnp.float32) / l
    return out.astype(query_states.dtype)


# ----------------------------------- glue (plain JAX) -----------------------------------
def rms_norm(x, weight, eps=RMS_EPS):
    xf = x.astype(jnp.float32)
    var = jnp.mean(xf * xf, axis=-1, keepdims=True)
    xf = xf * lax.rsqrt(var + eps)
    return (weight * xf.astype(x.dtype)).astype(x.dtype)


def rotary_cos_sin_cache(dim=QK_ROPE_HEAD_DIM, max_pos=MAX_POSITION_EMBEDDINGS,
                         base=ROPE_BASE):
    inv_freq = 1.0 / (base ** (jnp.arange(0, dim, 2, dtype=jnp.float32) / dim))
    t = jnp.arange(max_pos, dtype=jnp.float32)
    freqs = jnp.outer(t, inv_freq)
    emb = jnp.concatenate([freqs, freqs], axis=-1)
    return jnp.cos(emb).astype(DTYPE), jnp.sin(emb).astype(DTYPE)


def apply_rotary_pos_emb(q, cos_cached, sin_cached, position_ids):
    # q: [b, h, s, d]; matches the torch impl (de-interleave then rotate-half rope)
    cos = cos_cached[position_ids][:, None, :, :]
    sin = sin_cached[position_ids][:, None, :, :]
    b, h, s, d = q.shape
    q = q.reshape(b, h, s, d // 2, 2)
    q = jnp.swapaxes(q, -1, -2).reshape(b, h, s, d)
    q1, q2 = q[..., : d // 2], q[..., d // 2:]
    rot = jnp.concatenate([-q2, q1], axis=-1)
    return q * cos + rot * sin


def init_params(key):
    ks = jax.random.split(key, 4)
    init = lambda k, shape: (0.02 * jax.random.normal(k, shape)).astype(DTYPE)
    # nn.Linear weights stored as [out_features, in_features] (torch convention)
    return {
        "q_a_proj": init(ks[0], (Q_LORA_RANK, HIDDEN_SIZE)),
        "q_a_ln": jnp.ones((Q_LORA_RANK,), DTYPE),
        "q_b_proj": init(ks[1], (NUM_HEADS * Q_HEAD_DIM, Q_LORA_RANK)),
        "kv_b_proj": init(ks[2], (NUM_HEADS * (QK_NOPE_HEAD_DIM + V_HEAD_DIM),
                                  KV_LORA_RANK)),
        "o_proj": init(ks[3], (HIDDEN_SIZE, NUM_HEADS * V_HEAD_DIM)),
        # kv_a_proj_with_mqa / kv_a_layernorm only appear in compress_kv (not in forward)
    }


def deepseek_attention_forward(params, hidden_states_q, q_position_ids,
                               compressed_kv, attn_impl):
    bsz, q_len, _ = hidden_states_q.shape
    softmax_scale = 1.0 / math.sqrt(Q_HEAD_DIM)

    # q = q_b_proj(q_a_layernorm(q_a_proj(x)))
    q = hidden_states_q @ params["q_a_proj"].T
    q = rms_norm(q, params["q_a_ln"])
    q = q @ params["q_b_proj"].T
    q = q.reshape(bsz, q_len, NUM_HEADS, Q_HEAD_DIM).transpose(0, 2, 1, 3)
    q_nope = q[..., :QK_NOPE_HEAD_DIM]
    q_pe = q[..., QK_NOPE_HEAD_DIM:]

    cos, sin = rotary_cos_sin_cache()
    q_pe = apply_rotary_pos_emb(q_pe, cos, sin, q_position_ids)

    kv_b = params["kv_b_proj"].reshape(
        NUM_HEADS, QK_NOPE_HEAD_DIM + V_HEAD_DIM, KV_LORA_RANK)
    q_absorb = kv_b[:, :QK_NOPE_HEAD_DIM, :]     # [H, nope, rank]
    out_absorb = kv_b[:, QK_NOPE_HEAD_DIM:, :]   # [H, v, rank]

    # absorb W^UK into the query ("weight absorption")
    q_latent = jnp.einsum('hdc,bhid->bhic', q_absorb, q_nope)   # [b,H,q,rank]
    query_states = jnp.concatenate([q_latent, q_pe], axis=-1)   # [b,H,q,rank+rope]

    attn_c = attn_impl(query_states, compressed_kv, softmax_scale)  # [b,H,q,rank]

    attn_output = jnp.einsum('bhqc,hdc->bhqd', attn_c, out_absorb)  # [b,H,q,v]
    attn_output = attn_output.transpose(0, 2, 1, 3).reshape(
        bsz, q_len, NUM_HEADS * V_HEAD_DIM)
    return attn_output @ params["o_proj"].T


# ------------------------------------------ main ------------------------------------------
if __name__ == "__main__":
    root = jax.random.PRNGKey(0)
    keys = jax.random.split(root, 7)
    params = init_params(keys[0])

    def run_case(name, key_q, key_kv, bsz, q_len, kv_len, block_kv, num_kv_splits):
        hidden_states_q = jax.random.normal(key_q, (bsz, q_len, HIDDEN_SIZE), DTYPE)
        compressed_kv = jax.random.normal(key_kv, (bsz, kv_len, QK_HEAD_DIM), DTYPE)
        # decode-style positions: last q_len positions of the cache
        q_position_ids = jnp.broadcast_to(
            jnp.arange(kv_len - q_len, kv_len, dtype=jnp.int32), (bsz, q_len))

        out = deepseek_attention_forward(
            params, hidden_states_q, q_position_ids, compressed_kv,
            attn_impl=functools.partial(mla_attention_pallas, block_kv=block_kv,
                                        num_kv_splits=num_kv_splits))
        out = jax.block_until_ready(out)

        ref = deepseek_attention_forward(
            params, hidden_states_q, q_position_ids, compressed_kv,
            attn_impl=mla_attention_reference)
        assert out.shape == (bsz, q_len, HIDDEN_SIZE)
        rel_err = float(jnp.max(jnp.abs(out - ref)) / (jnp.max(jnp.abs(ref)) + 1e-9))
        assert rel_err < 2e-2, f"{name}: mismatch vs JAX reference (rel err {rel_err})"

    # single KV tile, default big block (matches the original small test shapes)
    run_case("small", keys[1], keys[2], bsz=2, q_len=4, kv_len=16,
             block_kv=DEFAULT_BLOCK_KV, num_kv_splits=None)
    # multi-tile KV: online softmax, interior fast path, masked padded tail
    run_case("tiled", keys[3], keys[4], bsz=2, q_len=4, kv_len=640,
             block_kv=256, num_kv_splits=1)
    # b=1 split-KV (flash-decoding) path with a partially-dead second split
    run_case("splitkv", keys[5], keys[6], bsz=1, q_len=4, kv_len=640,
             block_kv=256, num_kv_splits=2)

    print("KERNEL_OK")
</pallas_src>

<mosaic_0001>
module attributes {stable_mosaic.version = 11 : i64} {
  func.func @_mla_flash_kernel(%arg0: i32, %arg1: i32, %arg2: i32, %arg3: memref<16x1xi32, #tpu.memory_space<vmem>>, %arg4: memref<1x16x128xbf16, #tpu.memory_space<vmem>>, %arg5: memref<1x16x16xbf16, #tpu.memory_space<vmem>>, %arg6: memref<1x128x128xbf16, #tpu.memory_space<vmem>>, %arg7: memref<1x16x128xbf16, #tpu.memory_space<vmem>>, %arg8: memref<1x1x16x128xf32, #tpu.memory_space<vmem>>, %arg9: memref<1x1x16x1xf32, #tpu.memory_space<vmem>>, %arg10: memref<1x1x16x1xf32, #tpu.memory_space<vmem>>, %arg11: memref<16x1xf32, #tpu.memory_space<vmem>>, %arg12: memref<16x1xf32, #tpu.memory_space<vmem>>, %arg13: memref<16x128xf32, #tpu.memory_space<vmem>>) attributes {dimension_semantics = [#tpu.dimension_semantics<parallel>, #tpu.dimension_semantics<parallel>, #tpu.dimension_semantics<arbitrary>], iteration_bounds = array<i64: 2, 1, 1>, scalar_prefetch = 0 : i64, scratch_operands = 3 : i64, tpu.core_type = #tpu.core_type<tc>, window_params = [{pipeline_mode = #tpu.pipeline_mode<synchronous>, transform_indices = @transform_0, window_bounds = array<i64: 16, 1>}, {transform_indices = @transform_1, window_bounds = array<i64: 1, 16, 128>}, {transform_indices = @transform_2, window_bounds = array<i64: 1, 16, 16>}, {transform_indices = @transform_3, window_bounds = array<i64: 1, 128, 128>}, {transform_indices = @transform_4, window_bounds = array<i64: 1, 16, 128>}, {transform_indices = @transform_5, window_bounds = array<i64: 1, 1, 16, 128>}, {transform_indices = @transform_6, window_bounds = array<i64: 1, 1, 16, 1>}, {transform_indices = @transform_7, window_bounds = array<i64: 1, 1, 16, 1>}]} {
    %c0_i32 = arith.constant 0 : i32
    %0 = arith.cmpi eq, %arg2, %c0_i32 : i32
    %1 = arith.extui %0 : i1 to i32
    %c0_i32_0 = arith.constant 0 : i32
    %2 = arith.cmpi ne, %1, %c0_i32_0 : i32
    scf.if %2 {
      %cst_20 = arith.constant -1.000000e+30 : f32
      %30 = vector.broadcast %cst_20 : f32 to vector<16x1xf32>
      %c0_21 = arith.constant 0 : index
      %c0_22 = arith.constant 0 : index
      %31 = vector.load %arg11[%c0_21, %c0_22] : memref<16x1xf32, #tpu.memory_space<vmem>>, vector<16x1xf32>
      tpu.vector_store %arg11[%c0_21, %c0_22], %30 {strides = array<i32>} : memref<16x1xf32, #tpu.memory_space<vmem>>, vector<16x1xf32>,
      %cst_23 = arith.constant 0.000000e+00 : f32
      %32 = vector.broadcast %cst_23 : f32 to vector<16x1xf32>
      %c0_24 = arith.constant 0 : index
      %c0_25 = arith.constant 0 : index
      %33 = vector.load %arg12[%c0_24, %c0_25] : memref<16x1xf32, #tpu.memory_space<vmem>>, vector<16x1xf32>
      tpu.vector_store %arg12[%c0_24, %c0_25], %32 {strides = array<i32>} : memref<16x1xf32, #tpu.memory_space<vmem>>, vector<16x1xf32>,
      %cst_26 = arith.constant 0.000000e+00 : f32
      %34 = vector.broadcast %cst_26 : f32 to vector<16x128xf32>
      %c0_27 = arith.constant 0 : index
      %c0_28 = arith.constant 0 : index
      %35 = vector.load %arg13[%c0_27, %c0_28] : memref<16x128xf32, #tpu.memory_space<vmem>>, vector<16x128xf32>
      tpu.vector_store %arg13[%c0_27, %c0_28], %34 {strides = array<i32>} : memref<16x128xf32, #tpu.memory_space<vmem>>, vector<16x128xf32>,
    } else {
    }
    %c0 = arith.constant 0 : index
    %c0_1 = arith.constant 0 : index
    %c0_2 = arith.constant 0 : index
    %3 = vector.load %arg4[%c0, %c0_1, %c0_2] : memref<1x16x128xbf16, #tpu.memory_space<vmem>>, vector<1x16x128xbf16>
    %4 = vector.shape_cast %3 : vector<1x16x128xbf16> to vector<16x128xbf16>
    %c0_3 = arith.constant 0 : index
    %c0_4 = arith.constant 0 : index
    %c0_5 = arith.constant 0 : index
    %5 = vector.load %arg5[%c0_3, %c0_4, %c0_5] : memref<1x16x16xbf16, #tpu.memory_space<vmem>>, vector<1x16x16xbf16>
    %6 = vector.shape_cast %5 : vector<1x16x16xbf16> to vector<16x16xbf16>
    %c0_6 = arith.constant 0 : index
    %c0_7 = arith.constant 0 : index
    %c0_8 = arith.constant 0 : index
    %7 = vector.load %arg6[%c0_6, %c0_7, %c0_8] : memref<1x128x128xbf16, #tpu.memory_space<vmem>>, vector<1x128x128xbf16>
    %8 = vector.shape_cast %7 : vector<1x128x128xbf16> to vector<128x128xbf16>
    %c0_9 = arith.constant 0 : index
    %c0_10 = arith.constant 0 : index
    %c0_11 = arith.constant 0 : index
    %9 = vector.load %arg7[%c0_9, %c0_10, %c0_11] : memref<1x16x128xbf16, #tpu.memory_space<vmem>>, vector<1x16x128xbf16>
    %10 = vector.shape_cast %9 : vector<1x16x128xbf16> to vector<16x128xbf16>
    %cst = arith.constant dense<0.000000e+00> : vector<16x128xf32>
    %11 = tpu.matmul %4, %8, %cst {dimension_numbers = #tpu.dot_dimension_numbers<[1], [1], [0], [0], [0, 0, 1, 0], [], []>} : vector<16x128xbf16>, vector<128x128xbf16>, vector<16x128xf32> -> vector<16x128xf32>
    %cst_12 = arith.constant dense<0.000000e+00> : vector<16x128xf32>
    %12 = tpu.matmul %6, %10, %cst_12 {dimension_numbers = #tpu.dot_dimension_numbers<[1], [0], [0], [1], [0, 0, 1, 1], [], []>} : vector<16x16xbf16>, vector<16x128xbf16>, vector<16x128xf32> -> vector<16x128xf32>
    %13 = arith.addf %11, %12 : vector<16x128xf32>
    %cst_13 = arith.constant 0.144337565 : f32
    %14 = vector.broadcast %cst_13 : f32 to vector<16x128xf32>
    %15 = arith.mulf %13, %14 : vector<16x128xf32>
    %c1_i32 = arith.constant 1 : i32
    %16 = arith.muli %arg1, %c1_i32 : i32
    %17 = arith.addi %16, %arg2 : i32
    %c128_i32 = arith.constant 128 : i32
    %18 = arith.muli %17, %c128_i32 : i32
    %c127_i32 = arith.constant 127 : i32
    %19 = arith.addi %18, %c127_i32 : i32
    %c12_i32 = arith.constant 12 : i32
    %20 = arith.cmpi sgt, %19, %c12_i32 : i32
    %c0_14 = arith.constant 0 : index
    %c0_15 = arith.constant 0 : index
    %21 = vector.load %arg11[%c0_14, %c0_15] : memref<16x1xf32, #tpu.memory_space<vmem>>, vector<16x1xf32>
    %22 = arith.extui %20 : i1 to i32
    %c0_i32_16 = arith.constant 0 : i32
    %23 = arith.cmpi ne, %22, %c0_i32_16 : i32
    scf.if %23 {
      %30 = tpu.iota {dimensions = array<i32: 1>} : vector<16x128xi32>
      %31 = vector.broadcast %18 : i32 to vector<16x128xi32>
      %32 = arith.addi %31, %30 : vector<16x128xi32>
      %c0_20 = arith.constant 0 : index
      %c0_21 = arith.constant 0 : index
      %33 = vector.load %arg3[%c0_20, %c0_21] : memref<16x1xi32, #tpu.memory_space<vmem>>, vector<16x1xi32>
      %34 = vector.broadcast %33 : vector<16x1xi32> to vector<16x128xi32>
      %35 = arith.cmpi sle, %32, %34 : vector<16x128xi32>
      %cst_22 = arith.constant -1.000000e+30 : f32
      %36 = vector.broadcast %cst_22 : f32 to vector<16x128xf32>
      %37 = arith.select %35, %15, %36 : vector<16x128xi1>, vector<16x128xf32>
      %cst_23 = arith.constant dense<0xFF800000> : vector<16xf32>
      %38 = vector.multi_reduction <maximumf>, %37, %cst_23 [1] : vector<16x128xf32> to vector<16xf32>
      %39 = vector.shape_cast %38 : vector<16xf32> to vector<16x1xf32>
      %40 = arith.maximumf %21, %39 : vector<16x1xf32>
      %41 = arith.subf %21, %40 : vector<16x1xf32>
      %42 = math.exp %41 : vector<16x1xf32>
      %43 = vector.broadcast %40 : vector<16x1xf32> to vector<16x128xf32>
      %44 = arith.subf %37, %43 : vector<16x128xf32>
      %45 = math.exp %44 : vector<16x128xf32>
      %cst_24 = arith.constant 0.000000e+00 : f32
      %46 = vector.broadcast %cst_24 : f32 to vector<16x128xf32>
      %47 = arith.select %35, %45, %46 : vector<16x128xi1>, vector<16x128xf32>
      %c0_25 = arith.constant 0 : index
      %c0_26 = arith.constant 0 : index
      %48 = vector.load %arg12[%c0_25, %c0_26] : memref<16x1xf32, #tpu.memory_space<vmem>>, vector<16x1xf32>
      %49 = arith.mulf %42, %48 : vector<16x1xf32>
      %cst_27 = arith.constant dense<0.000000e+00> : vector<16xf32>
      %50 = vector.multi_reduction <add>, %47, %cst_27 [1] : vector<16x128xf32> to vector<16xf32>
      %51 = vector.shape_cast %50 : vector<16xf32> to vector<16x1xf32>
      %52 = arith.addf %49, %51 : vector<16x1xf32>
      %c0_28 = arith.constant 0 : index
      %c0_29 = arith.constant 0 : index
      %53 = vector.load %arg12[%c0_28, %c0_29] : memref<16x1xf32, #tpu.memory_space<vmem>>, vector<16x1xf32>
      tpu.vector_store %arg12[%c0_28, %c0_29], %52 {strides = array<i32>} : memref<16x1xf32, #tpu.memory_space<vmem>>, vector<16x1xf32>,
      %c0_30 = arith.constant 0 : index
      %c0_31 = arith.constant 0 : index
      %54 = vector.load %arg13[%c0_30, %c0_31] : memref<16x128xf32, #tpu.memory_space<vmem>>, vector<16x128xf32>
      %55 = vector.broadcast %42 : vector<16x1xf32> to vector<16x128xf32>
      %56 = arith.mulf %55, %54 : vector<16x128xf32>
      %57 = arith.truncf %47 : vector<16x128xf32> to vector<16x128xbf16>
      %cst_32 = arith.constant dense<0.000000e+00> : vector<16x128xf32>
      %58 = tpu.matmul %57, %8, %cst_32 {dimension_numbers = #tpu.dot_dimension_numbers<[1], [0], [0], [1], [0, 0, 1, 1], [], []>} : vector<16x128xbf16>, vector<128x128xbf16>, vector<16x128xf32> -> vector<16x128xf32>
      %59 = arith.addf %56, %58 : vector<16x128xf32>
      %c0_33 = arith.constant 0 : index
      %c0_34 = arith.constant 0 : index
      %60 = vector.load %arg13[%c0_33, %c0_34] : memref<16x128xf32, #tpu.memory_space<vmem>>, vector<16x128xf32>
      tpu.vector_store %arg13[%c0_33, %c0_34], %59 {strides = array<i32>} : memref<16x128xf32, #tpu.memory_space<vmem>>, vector<16x128xf32>,
      %c0_35 = arith.constant 0 : index
      %c0_36 = arith.constant 0 : index
      %61 = vector.load %arg11[%c0_35, %c0_36] : memref<16x1xf32, #tpu.memory_space<vmem>>, vector<16x1xf32>
      tpu.vector_store %arg11[%c0_35, %c0_36], %40 {strides = array<i32>} : memref<16x1xf32, #tpu.memory_space<vmem>>, vector<16x1xf32>,
    } else {
    }
    %true = arith.constant true
    %24 = arith.xori %20, %true : i1
    %25 = arith.extui %24 : i1 to i32
    %c0_i32_17 = arith.constant 0 : i32
    %26 = arith.cmpi ne, %25, %c0_i32_17 : i32
    scf.if %26 {
      %cst_20 = arith.constant dense<0xFF800000> : vector<16xf32>
      %30 = vector.multi_reduction <maximumf>, %15, %cst_20 [1] : vector<16x128xf32> to vector<16xf32>
      %31 = vector.shape_cast %30 : vector<16xf32> to vector<16x1xf32>
      %32 = arith.maximumf %21, %31 : vector<16x1xf32>
      %33 = arith.subf %21, %32 : vector<16x1xf32>
      %34 = math.exp %33 : vector<16x1xf32>
      %35 = vector.broadcast %32 : vector<16x1xf32> to vector<16x128xf32>
      %36 = arith.subf %15, %35 : vector<16x128xf32>
      %37 = math.exp %36 : vector<16x128xf32>
      %c0_21 = arith.constant 0 : index
      %c0_22 = arith.constant 0 : index
      %38 = vector.load %arg12[%c0_21, %c0_22] : memref<16x1xf32, #tpu.memory_space<vmem>>, vector<16x1xf32>
      %39 = arith.mulf %34, %38 : vector<16x1xf32>
      %cst_23 = arith.constant dense<0.000000e+00> : vector<16xf32>
      %40 = vector.multi_reduction <add>, %37, %cst_23 [1] : vector<16x128xf32> to vector<16xf32>
      %41 = vector.shape_cast %40 : vector<16xf32> to vector<16x1xf32>
      %42 = arith.addf %39, %41 : vector<16x1xf32>
      %c0_24 = arith.constant 0 : index
      %c0_25 = arith.constant 0 : index
      %43 = vector.load %arg12[%c0_24, %c0_25] : memref<16x1xf32, #tpu.memory_space<vmem>>, vector<16x1xf32>
      tpu.vector_store %arg12[%c0_24, %c0_25], %42 {strides = array<i32>} : memref<16x1xf32, #tpu.memory_space<vmem>>, vector<16x1xf32>,
      %c0_26 = arith.constant 0 : index
      %c0_27 = arith.constant 0 : index
      %44 = vector.load %arg13[%c0_26, %c0_27] : memref<16x128xf32, #tpu.memory_space<vmem>>, vector<16x128xf32>
      %45 = vector.broadcast %34 : vector<16x1xf32> to vector<16x128xf32>
      %46 = arith.mulf %45, %44 : vector<16x128xf32>
      %47 = arith.truncf %37 : vector<16x128xf32> to vector<16x128xbf16>
      %cst_28 = arith.constant dense<0.000000e+00> : vector<16x128xf32>
      %48 = tpu.matmul %47, %8, %cst_28 {dimension_numbers = #tpu.dot_dimension_numbers<[1], [0], [0], [1], [0, 0, 1, 1], [], []>} : vector<16x128xbf16>, vector<128x128xbf16>, vector<16x128xf32> -> vector<16x128xf32>
      %49 = arith.addf %46, %48 : vector<16x128xf32>
      %c0_29 = arith.constant 0 : index
      %c0_30 = arith.constant 0 : index
      %50 = vector.load %arg13[%c0_29, %c0_30] : memref<16x128xf32, #tpu.memory_space<vmem>>, vector<16x128xf32>
      tpu.vector_store %arg13[%c0_29, %c0_30], %49 {strides = array<i32>} : memref<16x128xf32, #tpu.memory_space<vmem>>, vector<16x128xf32>,
      %c0_31 = arith.constant 0 : index
      %c0_32 = arith.constant 0 : index
      %51 = vector.load %arg11[%c0_31, %c0_32] : memref<16x1xf32, #tpu.memory_space<vmem>>, vector<16x1xf32>
      tpu.vector_store %arg11[%c0_31, %c0_32], %32 {strides = array<i32>} : memref<16x1xf32, #tpu.memory_space<vmem>>, vector<16x1xf32>,
    } else {
    }
    %c0_i32_18 = arith.constant 0 : i32
    %27 = arith.cmpi eq, %arg2, %c0_i32_18 : i32
    %28 = arith.extui %27 : i1 to i32
    %c0_i32_19 = arith.constant 0 : i32
    %29 = arith.cmpi ne, %28, %c0_i32_19 : i32
    scf.if %29 {
      %c0_20 = arith.constant 0 : index
      %c0_21 = arith.constant 0 : index
      %30 = vector.load %arg13[%c0_20, %c0_21] : memref<16x128xf32, #tpu.memory_space<vmem>>, vector<16x128xf32>
      %c0_22 = arith.constant 0 : index
      %c0_23 = arith.constant 0 : index
      %c0_24 = arith.constant 0 : index
      %c0_25 = arith.constant 0 : index
      %31 = vector.load %arg8[%c0_22, %c0_23, %c0_24, %c0_25] : memref<1x1x16x128xf32, #tpu.memory_space<vmem>>, vector<1x1x16x128xf32>
      %32 = vector.shape_cast %31 : vector<1x1x16x128xf32> to vector<16x128xf32>
      %33 = vector.shape_cast %30 : vector<16x128xf32> to vector<1x1x16x128xf32>
      tpu.vector_store %arg8[%c0_22, %c0_23, %c0_24, %c0_25], %33 {strides = array<i32>} : memref<1x1x16x128xf32, #tpu.memory_space<vmem>>, vector<1x1x16x128xf32>,
      %c0_26 = arith.constant 0 : index
      %c0_27 = arith.constant 0 : index
      %34 = vector.load %arg11[%c0_26, %c0_27] : memref<16x1xf32, #tpu.memory_space<vmem>>, vector<16x1xf32>
      %c0_28 = arith.constant 0 : index
      %c0_29 = arith.constant 0 : index
      %c0_30 = arith.constant 0 : index
      %c0_31 = arith.constant 0 : index
      %35 = vector.load %arg9[%c0_28, %c0_29, %c0_30, %c0_31] : memref<1x1x16x1xf32, #tpu.memory_space<vmem>>, vector<1x1x16x1xf32>
      %36 = vector.shape_cast %35 : vector<1x1x16x1xf32> to vector<16x1xf32>
      %37 = vector.shape_cast %34 : vector<16x1xf32> to vector<1x1x16x1xf32>
      tpu.vector_store %arg9[%c0_28, %c0_29, %c0_30, %c0_31], %37 {strides = array<i32>} : memref<1x1x16x1xf32, #tpu.memory_space<vmem>>, vector<1x1x16x1xf32>,
      %c0_32 = arith.constant 0 : index
      %c0_33 = arith.constant 0 : index
      %38 = vector.load %arg12[%c0_32, %c0_33] : memref<16x1xf32, #tpu.memory_space<vmem>>, vector<16x1xf32>
      %c0_34 = arith.constant 0 : index
      %c0_35 = arith.constant 0 : index
      %c0_36 = arith.constant 0 : index
      %c0_37 = arith.constant 0 : index
      %39 = vector.load %arg10[%c0_34, %c0_35, %c0_36, %c0_37] : memref<1x1x16x1xf32, #tpu.memory_space<vmem>>, vector<1x1x16x1xf32>
      %40 = vector.shape_cast %39 : vector<1x1x16x1xf32> to vector<16x1xf32>
      %41 = vector.shape_cast %38 : vector<16x1xf32> to vector<1x1x16x1xf32>
      tpu.vector_store %arg10[%c0_34, %c0_35, %c0_36, %c0_37], %41 {strides = array<i32>} : memref<1x1x16x1xf32, #tpu.memory_space<vmem>>, vector<1x1x16x1xf32>,
    } else {
    }
    return
  }
  func.func @transform_0(%arg0: i32, %arg1: i32, %arg2: i32) -> (i32, i32) {
    %c0_i32 = arith.constant 0 : i32
    %c0_i32_0 = arith.constant 0 : i32
    %c0_i32_1 = arith.constant 0 : i32
    return %c0_i32, %c0_i32_0 : i32, i32
  }
  func.func @transform_1(%arg0: i32, %arg1: i32, %arg2: i32) -> (i32, i32, i32) {
    %c0_i32 = arith.constant 0 : i32
    %c0_i32_0 = arith.constant 0 : i32
    %c0_i32_1 = arith.constant 0 : i32
    return %arg0, %c0_i32, %c0_i32_0 : i32, i32, i32
  }
  func.func @transform_2(%arg0: i32, %arg1: i32, %arg2: i32) -> (i32, i32, i32) {
    %c0_i32 = arith.constant 0 : i32
    %c0_i32_0 = arith.constant 0 : i32
    %c0_i32_1 = arith.constant 0 : i32
    return %arg0, %c0_i32, %c0_i32_0 : i32, i32, i32
  }
  func.func @transform_3(%arg0: i32, %arg1: i32, %arg2: i32) -> (i32, i32, i32) {
    %c1_i32 = arith.constant 1 : i32
    %0 = arith.muli %arg1, %c1_i32 : i32
    %1 = arith.addi %0, %arg2 : i32
    %c0_i32 = arith.constant 0 : i32
    %c0_i32_0 = arith.constant 0 : i32
    return %arg0, %1, %c0_i32 : i32, i32, i32
  }
  func.func @transform_4(%arg0: i32, %arg1: i32, %arg2: i32) -> (i32, i32, i32) {
    %c1_i32 = arith.constant 1 : i32
    %0 = arith.muli %arg1, %c1_i32 : i32
    %1 = arith.addi %0, %arg2 : i32
    %c0_i32 = arith.constant 0 : i32
    %c0_i32_0 = arith.constant 0 : i32
    return %arg0, %c0_i32, %1 : i32, i32, i32
  }
  func.func @transform_5(%arg0: i32, %arg1: i32, %arg2: i32) -> (i32, i32, i32, i32) {
    %c0_i32 = arith.constant 0 : i32
    %c0_i32_0 = arith.constant 0 : i32
    %c0_i32_1 = arith.constant 0 : i32
    return %arg0, %arg1, %c0_i32, %c0_i32_0 : i32, i32, i32, i32
  }
  func.func @transform_6(%arg0: i32, %arg1: i32, %arg2: i32) -> (i32, i32, i32, i32) {
    %c0_i32 = arith.constant 0 : i32
    %c0_i32_0 = arith.constant 0 : i32
    %c0_i32_1 = arith.constant 0 : i32
    return %arg0, %arg1, %c0_i32, %c0_i32_0 : i32, i32, i32, i32
  }
  func.func @transform_7(%arg0: i32, %arg1: i32, %arg2: i32) -> (i32, i32, i32, i32) {
    %c0_i32 = arith.constant 0 : i32
    %c0_i32_0 = arith.constant 0 : i32
    %c0_i32_1 = arith.constant 0 : i32
    return %arg0, %arg1, %c0_i32, %c0_i32_0 : i32, i32, i32, i32
  }
}

</mosaic_0001>

<llo_original>
// kernel: tpu_custom_call.1
$region0: #{tpu_custom_call.1}
  #allocation0 [shape = 'u32[]', space=smem, size = 0x4, offset = 0x4, fixed_abs, tag = 'smem constant byte address 0x4 - core index']
  #allocation1 [shape = 'u32[72,128]{1,0:T(1,128)}', space=vmem, size = 0x9000, scoped, tag = 'internal scratch']
  #allocation2 [shape = 'f32[16,1]{1,0:T(8,128)}', space=vmem, size = 0x2000, scoped, tag = 'scratch operand']
  #allocation3 [shape = 'f32[16,1]{1,0:T(8,128)}', space=vmem, size = 0x2000, scoped, tag = 'scratch operand']
  #allocation4 [shape = 'f32[16,128]{1,0:T(8,128)}', space=vmem, size = 0x2000, scoped, tag = 'scratch operand']
  %s0 = inlined_call_operand.vmem [shape: s32[16,1], index: 0, kind: input, shape index: {}]
  %s1 = inlined_call_operand.vmem [shape: bf16[2,16,128], index: 1, kind: input, shape index: {}]
  %s2 = inlined_call_operand.hbm [shape: bf16[2,16,16], index: 2, kind: input, shape index: {}]
  %s3 = inlined_call_operand.hbm [shape: bf16[2,128,128], index: 3, kind: input, shape index: {}]
  %s4 = inlined_call_operand.hbm [shape: bf16[2,16,128], index: 4, kind: input, shape index: {}]
  %s5 = inlined_call_operand.hbm [shape: f32[2,1,16,128], index: 5, kind: output, shape index: {0}]
  %s6 = inlined_call_operand.vmem [shape: f32[2,1,16,1], index: 6, kind: output, shape index: {1}]
  %s7 = inlined_call_operand.vmem [shape: f32[2,1,16,1], index: 7, kind: output, shape index: {2}]
  %8 = xla_tuple %s5, %s6, %s7
  %s9 = sld [smem:[#allocation0]]
  $region97: #{tpu_custom_call.1} parent=0
    _
  %s11 = ssub.s32 1, %s9
  %s12 = scalar_select 0, %s11, %s9
  $region1: #{tpu_custom_call.1} parent=0
    #allocation5 [shape = 'u8[8192]{0}', space=vmem, size = 0x2000, scoped, tag = 'input window, operand 2']
    #allocation6 [shape = 's32[2]{0}', space=sflag, size = 0x8, scoped, tag = 'scoped memory for tpu_custom_call.1']
    #allocation7 [shape = 's32[2]{0}', space=sflag, size = 0x8, scoped, tag = 'scoped memory for tpu_custom_call.1']
    #allocation8 [shape = 'u8[65536]{0}', space=vmem, size = 0x10000, scoped, tag = 'input window, operand 3']
    #allocation9 [shape = 's32[2]{0}', space=sflag, size = 0x8, scoped, tag = 'scoped memory for tpu_custom_call.1']
    #allocation10 [shape = 'u8[8192]{0}', space=vmem, size = 0x2000, scoped, tag = 'input window, operand 4']
    #allocation11 [shape = 'u8[16384]{0}', space=vmem, size = 0x4000, scoped, tag = 'output window, operand 0']
    %13 = vsyncpa [#allocation6], 0
    %s14 = scalar_lea.sflag [#allocation6], 1
    %15 = vsyncpa %s14, 0
    %16 = vsyncpa [#allocation9], 0
    %s17 = scalar_lea.sflag [#allocation9], 1
    %18 = vsyncpa %s17, 0
    %19 = vsyncpa [#allocation7], 0
    %s20 = scalar_lea.sflag [#allocation7], 1
    %21 = vsyncpa %s20, 0
    loop: start=0, step=1, limit=4
    $region2: #{tpu_custom_call.1} parent=1 // loop_pre_header
      _
    $region3: #{tpu_custom_call.1} parent=1 // loop_header
      %s23 = sphi 0, %s27
      %p24 = scmp.ge.s32.totalorder %s23, 4
      %s30 = sphi 0, %s49
      %s31 = sphi 0, %s45
      %s32 = sphi 0, %s41
      %s33 = sphi 0, %s30
      %s34 = sphi 0, %s31
      %s35 = sphi 0, %s32
      %s36 = sphi 0, %s33
      %s37 = sphi 0, %s34
      %s38 = sphi 0, %s35
      %s50 = sphi 0, %s50
      %s52 = sphi 0, %s50
      %s53 = sphi 0, %s52
      %s67 = sphi 0, %s53
      %s73 = sphi 0, %s75
      %s76 = sphi 0, %s73
      %s77 = sphi 0, %s76
      %s93 = sphi 0, %s77
      %s99 = sphi 0, %s101
      %s102 = sphi 0, %s99
      %s103 = sphi 0, %s102
      %s119 = sphi 0, %s103
      %s129 = sphi 0, %s131
      %s132 = sphi 0, %s129
      %s133 = sphi 0, %s132
      %s149 = sphi 0, %s133
      %s159 = sphi 0, %s161
      %s162 = sphi 0, %s159
      %s163 = sphi 0, %s162
      %s179 = sphi 0, %s163
      %s187 = sphi 0, %s189
      %s190 = sphi 0, %s187
      %s191 = sphi 0, %s190
      %s207 = sphi 0, %s191
      %s215 = sphi 0, %s217
      %s218 = sphi 0, %s215
      %s219 = sphi 0, %s218
      %s235 = sphi 0, %s219
      %s243 = sphi 0, %s245
      %s246 = sphi 0, %s243
      %s247 = sphi 0, %s246
      %s263 = sphi 0, %s247
    $region4: #{tpu_custom_call.1} parent=1 // loop_header_branch
      %26 = sbr.rel (%p24) target = $region8
    $region5: #{tpu_custom_call.1} parent=1 // loop_body
      %s28 = ssub.s32 %s23, 1
      %s29 = ssub.s32 %s23, 2
      %s39 = sadd.s32 1, %s32
      %p40 = scmp.ge.s32.totalorder %s39, 1
      %s41 = scalar_select %p40, 0, %s39
      %s42 = sadd.s32 1, %s31
      %s43 = scalar_select %p40, %s42, %s31
      %p44 = scmp.ge.s32.totalorder %s43, 1
      %s45 = scalar_select %p44, 0, %s43
      %s46 = sadd.s32 1, %s30
      %s47 = scalar_select %p44, %s46, %s30
      %p48 = scmp.ge.s32.totalorder %s47, 2
      %s49 = scalar_select %p48, 0, %s47
      %s51 = sadd.s32 %s50, 1
      %p54 = scmp.eq.s32.totalorder %s23, 1
      %p55 = scmp.ne.s32.totalorder %s50, %s52
      %p56 = scmp.eq.s32.totalorder %s23, 0
      %p57 = por %p55, %p56
      %p58 = scmp.ne.s32.totalorder %s50, %s52
      %p59 = scmp.eq.s32.totalorder %s28, 1
      %p60 = por %p58, %p59
      %p61 = scmp.ne.s32.totalorder %s52, %s53
      %p62 = scmp.eq.s32.totalorder %s28, 0
      %p63 = por %p61, %p62
      %p64 = scmp.ne.s32.totalorder %s52, %s53
      %p65 = scmp.eq.s32.totalorder %s29, 1
      %p66 = por %p64, %p65
      %p68 = scmp.ne.s32.totalorder %s53, %s67
      %p69 = scmp.eq.s32.totalorder %s29, 0
      %p70 = por %p68, %p69
      %s71 = ssub.s32 %s30, %s49
      %p72 = scmp.eq.s32.totalorder %s71, 0
      %s74 = sadd.s32 %s73, 1
      %s75 = scalar_select %p72, %s73, %s74
      %p78 = pneg %p72
      %p79 = scmp.eq.s32.totalorder %s23, 1
      %p80 = por %p78, %p79
      %p81 = scmp.ne.s32.totalorder %s73, %s76
      %p82 = scmp.eq.s32.totalorder %s23, 0
      %p83 = por %p81, %p82
      %p84 = scmp.ne.s32.totalorder %s73, %s76
      %p85 = scmp.eq.s32.totalorder %s28, 1
      %p86 = por %p84, %p85
      %p87 = scmp.ne.s32.totalorder %s76, %s77
      %p88 = scmp.eq.s32.totalorder %s28, 0
      %p89 = por %p87, %p88
      %p90 = scmp.ne.s32.totalorder %s76, %s77
      %p91 = scmp.eq.s32.totalorder %s29, 1
      %p92 = por %p90, %p91
      %p94 = scmp.ne.s32.totalorder %s77, %s93
      %p95 = scmp.eq.s32.totalorder %s29, 0
      %p96 = por %p94, %p95
      %s97 = ssub.s32 %s30, %s49
      %p98 = scmp.eq.s32.totalorder %s97, 0
      %s100 = sadd.s32 %s99, 1
      %s101 = scalar_select %p98, %s99, %s100
      %p104 = pneg %p98
      %p105 = scmp.eq.s32.totalorder %s23, 1
      %p106 = por %p104, %p105
      %p107 = scmp.ne.s32.totalorder %s99, %s102
      %p108 = scmp.eq.s32.totalorder %s23, 0
      %p109 = por %p107, %p108
      %p110 = scmp.ne.s32.totalorder %s99, %s102
      %p111 = scmp.eq.s32.totalorder %s28, 1
      %p112 = por %p110, %p111
      %p113 = scmp.ne.s32.totalorder %s102, %s103
      %p114 = scmp.eq.s32.totalorder %s28, 0
      %p115 = por %p113, %p114
      %p116 = scmp.ne.s32.totalorder %s102, %s103
      %p117 = scmp.eq.s32.totalorder %s29, 1
      %p118 = por %p116, %p117
      %p120 = scmp.ne.s32.totalorder %s103, %s119
      %p121 = scmp.eq.s32.totalorder %s29, 0
      %p122 = por %p120, %p121
      %s123 = sadd.s32 %s31, %s32
      %s124 = sadd.s32 %s45, %s41
      %s125 = ssub.s32 %s30, %s49
      %s126 = ssub.s32 %s123, %s124
      %s127 = sor.u32 %s125, %s126
      %p128 = scmp.eq.s32.totalorder %s127, 0
      %s130 = sadd.s32 %s129, 1
      %s131 = scalar_select %p128, %s129, %s130
      %p134 = pneg %p128
      %p135 = scmp.eq.s32.totalorder %s23, 1
      %p136 = por %p134, %p135
      %p137 = scmp.ne.s32.totalorder %s129, %s132
      %p138 = scmp.eq.s32.totalorder %s23, 0
      %p139 = por %p137, %p138
      %p140 = scmp.ne.s32.totalorder %s129, %s132
      %p141 = scmp.eq.s32.totalorder %s28, 1
      %p142 = por %p140, %p141
      %p143 = scmp.ne.s32.totalorder %s132, %s133
      %p144 = scmp.eq.s32.totalorder %s28, 0
      %p145 = por %p143, %p144
      %p146 = scmp.ne.s32.totalorder %s132, %s133
      %p147 = scmp.eq.s32.totalorder %s29, 1
      %p148 = por %p146, %p147
      %p150 = scmp.ne.s32.totalorder %s133, %s149
      %p151 = scmp.eq.s32.totalorder %s29, 0
      %p152 = por %p150, %p151
      %s153 = sadd.s32 %s31, %s32
      %s154 = sadd.s32 %s45, %s41
      %s155 = ssub.s32 %s30, %s49
      %s156 = ssub.s32 %s153, %s154
      %s157 = sor.u32 %s155, %s156
      %p158 = scmp.eq.s32.totalorder %s157, 0
      %s160 = sadd.s32 %s159, 1
      %s161 = scalar_select %p158, %s159, %s160
      %p164 = pneg %p158
      %p165 = scmp.eq.s32.totalorder %s23, 1
      %p166 = por %p164, %p165
      %p167 = scmp.ne.s32.totalorder %s159, %s162
      %p168 = scmp.eq.s32.totalorder %s23, 0
      %p169 = por %p167, %p168
      %p170 = scmp.ne.s32.totalorder %s159, %s162
      %p171 = scmp.eq.s32.totalorder %s28, 1
      %p172 = por %p170, %p171
      %p173 = scmp.ne.s32.totalorder %s162, %s163
      %p174 = scmp.eq.s32.totalorder %s28, 0
      %p175 = por %p173, %p174
      %p176 = scmp.ne.s32.totalorder %s162, %s163
      %p177 = scmp.eq.s32.totalorder %s29, 1
      %p178 = por %p176, %p177
      %p180 = scmp.ne.s32.totalorder %s163, %s179
      %p181 = scmp.eq.s32.totalorder %s29, 0
      %p182 = por %p180, %p181
      %s183 = ssub.s32 %s30, %s49
      %s184 = ssub.s32 %s31, %s45
      %s185 = sor.u32 %s183, %s184
      %p186 = scmp.eq.s32.totalorder %s185, 0
      %s188 = sadd.s32 %s187, 1
      %s189 = scalar_select %p186, %s187, %s188
      %p192 = pneg %p186
      %p193 = scmp.eq.s32.totalorder %s23, 1
      %p194 = por %p192, %p193
      %p195 = scmp.ne.s32.totalorder %s187, %s190
      %p196 = scmp.eq.s32.totalorder %s23, 0
      %p197 = por %p195, %p196
      %p198 = scmp.ne.s32.totalorder %s187, %s190
      %p199 = scmp.eq.s32.totalorder %s28, 1
      %p200 = por %p198, %p199
      %p201 = scmp.ne.s32.totalorder %s190, %s191
      %p202 = scmp.eq.s32.totalorder %s28, 0
      %p203 = por %p201, %p202
      %p204 = scmp.ne.s32.totalorder %s190, %s191
      %p205 = scmp.eq.s32.totalorder %s29, 1
      %p206 = por %p204, %p205
      %p208 = scmp.ne.s32.totalorder %s191, %s207
      %p209 = scmp.eq.s32.totalorder %s29, 0
      %p210 = por %p208, %p209
      %s211 = ssub.s32 %s30, %s49
      %s212 = ssub.s32 %s31, %s45
      %s213 = sor.u32 %s211, %s212
      %p214 = scmp.eq.s32.totalorder %s213, 0
      %s216 = sadd.s32 %s215, 1
      %s217 = scalar_select %p214, %s215, %s216
      %p220 = pneg %p214
      %p221 = scmp.eq.s32.totalorder %s23, 1
      %p222 = por %p220, %p221
      %p223 = scmp.ne.s32.totalorder %s215, %s218
      %p224 = scmp.eq.s32.totalorder %s23, 0
      %p225 = por %p223, %p224
      %p226 = scmp.ne.s32.totalorder %s215, %s218
      %p227 = scmp.eq.s32.totalorder %s28, 1
      %p228 = por %p226, %p227
      %p229 = scmp.ne.s32.totalorder %s218, %s219
      %p230 = scmp.eq.s32.totalorder %s28, 0
      %p231 = por %p229, %p230
      %p232 = scmp.ne.s32.totalorder %s218, %s219
      %p233 = scmp.eq.s32.totalorder %s29, 1
      %p234 = por %p232, %p233
      %p236 = scmp.ne.s32.totalorder %s219, %s235
      %p237 = scmp.eq.s32.totalorder %s29, 0
      %p238 = por %p236, %p237
      %s239 = ssub.s32 %s30, %s49
      %s240 = ssub.s32 %s31, %s45
      %s241 = sor.u32 %s239, %s240
      %p242 = scmp.eq.s32.totalorder %s241, 0
      %s244 = sadd.s32 %s243, 1
      %s245 = scalar_select %p242, %s243, %s244
      %p248 = pneg %p242
      %p249 = scmp.eq.s32.totalorder %s23, 1
      %p250 = por %p248, %p249
      %p251 = scmp.ne.s32.totalorder %s243, %s246
      %p252 = scmp.eq.s32.totalorder %s23, 0
      %p253 = por %p251, %p252
      %p254 = scmp.ne.s32.totalorder %s243, %s246
      %p255 = scmp.eq.s32.totalorder %s28, 1
      %p256 = por %p254, %p255
      %p257 = scmp.ne.s32.totalorder %s246, %s247
      %p258 = scmp.eq.s32.totalorder %s28, 0
      %p259 = por %p257, %p258
      %p260 = scmp.ne.s32.totalorder %s246, %s247
      %p261 = scmp.eq.s32.totalorder %s29, 1
      %p262 = por %p260, %p261
      %p264 = scmp.ne.s32.totalorder %s247, %s263
      %p265 = scmp.eq.s32.totalorder %s29, 0
      %p266 = por %p264, %p265
      %p267 = scmp.le.s32.totalorder 1, %s23
      %p268 = scmp.lt.s32.totalorder %s23, 3
      %p269 = pnand %p267, %p268
      %p270 = pneg %p269
      // Predicated region
      $region9: #{tpu_custom_call.1} parent=5 // pred_check
        _
      $region10: #{tpu_custom_call.1} parent=5 // pred_check_branch
        %272 = sbr.rel (%p269) target = $region12
      $region11: #{tpu_custom_call.1} parent=5 // pred_region
        %s273 = ssub.s32 %s23, 1
        // Predicated region
        $region13: #{tpu_custom_call.1} parent=11 // pred_check
          %p274 = pneg %p63
        $region14: #{tpu_custom_call.1} parent=11 // pred_check_branch
          %276 = sbr.rel (%p274) target = $region16
        $region15: #{tpu_custom_call.1} parent=11 // pred_region
          _
        $region16: #{tpu_custom_call.1} parent=11 // pred_fallthru
          _
      $region12: #{tpu_custom_call.1} parent=5 // pred_fallthru
        _
      %p277 = scmp.lt.s32.totalorder %s23, 2
      // Predicated region
      $region17: #{tpu_custom_call.1} parent=5 // pred_check
        %p278 = pneg %p277
      $region18: #{tpu_custom_call.1} parent=5 // pred_check_branch
        %280 = sbr.rel (%p278) target = $region20
      $region19: #{tpu_custom_call.1} parent=5 // pred_region
        // Predicated region
        $region21: #{tpu_custom_call.1} parent=19 // pred_check
          %p281 = pneg %p83
        $region22: #{tpu_custom_call.1} parent=19 // pred_check_branch
          %283 = sbr.rel (%p281) target = $region24
        $region23: #{tpu_custom_call.1} parent=19 // pred_region
          %p284 = scmp.lt.s32.totalorder %s30, 1
          %s285 = scalar_select %p284, %s30, 1
          %s286 = smul.addr %s285, 2
          %s287 = smul.addr %s286, 4
          %s288 = scalar_lea.vmem %s1, %s287
        $region24: #{tpu_custom_call.1} parent=19 // pred_fallthru
          _
        // Predicated region
        $region25: #{tpu_custom_call.1} parent=19 // pred_check
          %p289 = pneg %p109
        $region26: #{tpu_custom_call.1} parent=19 // pred_check_branch
          %291 = sbr.rel (%p289) target = $region28
        $region27: #{tpu_custom_call.1} parent=19 // pred_region
          %s292 = sand.u32 %s99, 1
          %s293 = scalar_lea.sflag [#allocation6], %s292
          %s294 = sand.u32 %s99, 1
          %s295 = smul.addr %s294, 8
          %s296 = scalar_lea.vmem [#allocation5], %s295
          %298 = vsyncadd %s293, 0
          %s299 = smul.addr %s30, 2
          %s300 = smul.addr %s299, 4
          %s301 = scalar_lea.hbm %s2, %s300
          %s302 = sshll.u32 %s301, 4
          %s303 = int_to_ptr.hbm [resolvable:$true] %s302
          %s304 = sshll.u32 %s296, 4
          %s305 = int_to_ptr.vmem [resolvable:$true] %s304
          %310 = dma.hbm_to_vmem [thread:$0]  %s303, 128, %s305, %s293, 64, 64, 4
        $region28: #{tpu_custom_call.1} parent=19 // pred_fallthru
          _
        // Predicated region
        $region29: #{tpu_custom_call.1} parent=19 // pred_check
          %p311 = pneg %p139
        $region30: #{tpu_custom_call.1} parent=19 // pred_check_branch
          %313 = sbr.rel (%p311) target = $region32
        $region31: #{tpu_custom_call.1} parent=19 // pred_region
          %s314 = sand.u32 %s23, 1
          %s315 = scalar_lea.sflag [#allocation9], %s314
          %s316 = sand.u32 %s129, 1
          %s317 = smul.addr %s316, 64
          %s318 = scalar_lea.vmem [#allocation8], %s317
          %s319 = sadd.s32 %s31, %s32
          %s320 = smul.u32 16, %s319
          %322 = vsyncadd %s315, 0
          %s323 = smul.addr %s30, 16
          %s324 = sadd.s32 %s320, %s323
          %s325 = smul.addr %s324, 4
          %s326 = scalar_lea.hbm %s3, %s325
          %s327 = sshll.u32 %s326, 4
          %s328 = int_to_ptr.hbm [resolvable:$true] %s327
          %s329 = sshll.u32 %s318, 4
          %s330 = int_to_ptr.vmem [resolvable:$true] %s329
          %335 = dma.hbm_to_vmem [thread:$0]  %s328, 1024, %s330, %s315, 64, 64, 4
        $region32: #{tpu_custom_call.1} parent=19 // pred_fallthru
          _
        // Predicated region
        $region33: #{tpu_custom_call.1} parent=19 // pred_check
          %p336 = pneg %p169
        $region34: #{tpu_custom_call.1} parent=19 // pred_check_branch
          %338 = sbr.rel (%p336) target = $region36
        $region35: #{tpu_custom_call.1} parent=19 // pred_region
          %s339 = sand.u32 %s23, 1
          %s340 = scalar_lea.sflag [#allocation9], %s339
          %s341 = sand.u32 %s159, 1
          %s342 = smul.addr %s341, 8
          %s343 = scalar_lea.vmem [#allocation10], %s342
          %s344 = sadd.s32 %s31, %s32
          %346 = vsyncadd %s340, 0
          %s347 = smul.addr %s30, 2
          %s348 = sadd.s32 %s344, %s347
          %s349 = smul.addr %s348, 4
          %s350 = scalar_lea.hbm %s4, %s349
          %s351 = sshll.u32 %s350, 4
          %s352 = int_to_ptr.hbm [resolvable:$true] %s351
          %s353 = sshll.u32 %s343, 4
          %s354 = int_to_ptr.vmem [resolvable:$true] %s353
          %359 = dma.hbm_to_vmem [thread:$0]  %s352, 128, %s354, %s340, 64, 64, 4
        $region36: #{tpu_custom_call.1} parent=19 // pred_fallthru
          _
      $region20: #{tpu_custom_call.1} parent=5 // pred_fallthru
        _
      %p360 = scmp.le.s32.totalorder 1, %s23
      %p361 = scmp.lt.s32.totalorder %s23, 3
      %p362 = pnand %p360, %p361
      %p363 = pneg %p362
      // Predicated region
      $region37: #{tpu_custom_call.1} parent=5 // pred_check
        _
      $region38: #{tpu_custom_call.1} parent=5 // pred_check_branch
        %365 = sbr.rel (%p362) target = $region40
      $region39: #{tpu_custom_call.1} parent=5 // pred_region
        %s366 = ssub.s32 %s23, 1
        %s367 = sand.u32 %s102, 1
        %s368 = scalar_lea.sflag [#allocation6], %s367
        %s369 = sand.u32 %s102, 1
        %s370 = smul.addr %s369, 8
        %s371 = scalar_lea.vmem [#allocation5], %s370
        // Predicated region
        $region41: #{tpu_custom_call.1} parent=39 // pred_check
          %p372 = pneg %p115
        $region42: #{tpu_custom_call.1} parent=39 // pred_check_branch
          %374 = sbr.rel (%p372) target = $region44
        $region43: #{tpu_custom_call.1} parent=39 // pred_region
          %376 = dma.done %s368, 128
        $region44: #{tpu_custom_call.1} parent=39 // pred_fallthru
          _
        %s377 = sand.u32 %s28, 1
        %s378 = scalar_lea.sflag [#allocation9], %s377
        %s379 = sand.u32 %s132, 1
        %s380 = smul.addr %s379, 64
        %s381 = scalar_lea.vmem [#allocation8], %s380
        // Predicated region
        $region45: #{tpu_custom_call.1} parent=39 // pred_check
          %p382 = pneg %p145
        $region46: #{tpu_custom_call.1} parent=39 // pred_check_branch
          %384 = sbr.rel (%p382) target = $region48
        $region47: #{tpu_custom_call.1} parent=39 // pred_region
          %386 = dma.done %s378, 1024
        $region48: #{tpu_custom_call.1} parent=39 // pred_fallthru
          _
        %s387 = sand.u32 %s28, 1
        %s388 = scalar_lea.sflag [#allocation9], %s387
        %s389 = sand.u32 %s162, 1
        %s390 = smul.addr %s389, 8
        %s391 = scalar_lea.vmem [#allocation10], %s390
        // Predicated region
        $region49: #{tpu_custom_call.1} parent=39 // pred_check
          %p392 = pneg %p175
        $region50: #{tpu_custom_call.1} parent=39 // pred_check_branch
          %394 = sbr.rel (%p392) target = $region52
        $region51: #{tpu_custom_call.1} parent=39 // pred_region
          %396 = dma.done %s388, 128
        $region52: #{tpu_custom_call.1} parent=39 // pred_fallthru
          _
        %p397 = pneg %p63
        %p398 = pneg %p60
        %p399 = scmp.lt.s32.totalorder %s33, 1
        %s400 = scalar_select %p399, %s33, 1
        %s401 = smul.addr %s400, 2
        %s402 = smul.addr %s401, 4
        %s403 = scalar_lea.vmem %s1, %s402
        %p404 = pneg %p89
        %p405 = pneg %p86
        %s406 = sand.u32 %s102, 1
        %s407 = scalar_lea.sflag [#allocation6], %s406
        %s408 = sand.u32 %s102, 1
        %s409 = smul.addr %s408, 8
        %s410 = scalar_lea.vmem [#allocation5], %s409
        %p411 = pneg %p115
        %p412 = pneg %p112
        %s413 = sand.u32 %s28, 1
        %s414 = scalar_lea.sflag [#allocation9], %s413
        %s415 = sand.u32 %s132, 1
        %s416 = smul.addr %s415, 64
        %s417 = scalar_lea.vmem [#allocation8], %s416
        %p418 = pneg %p145
        %p419 = pneg %p142
        %s420 = sand.u32 %s28, 1
        %s421 = scalar_lea.sflag [#allocation9], %s420
        %s422 = sand.u32 %s162, 1
        %s423 = smul.addr %s422, 8
        %s424 = scalar_lea.vmem [#allocation10], %s423
        %p425 = pneg %p175
        %p426 = pneg %p172
        %p427 = pneg %p203
        %p428 = pneg %p200
        %s429 = sand.u32 %s190, 1
        %s430 = scalar_lea.sflag [#allocation7], %s429
        %s431 = sand.u32 %s190, 1
        %s432 = smul.addr %s431, 16
        %s433 = scalar_lea.vmem [#allocation11], %s432
        %p434 = pneg %p231
        %p435 = pneg %p228
        %p436 = scmp.lt.s32.totalorder %s33, 1
        %s437 = scalar_select %p436, %s33, 1
        %p438 = scmp.lt.s32.totalorder %s34, 0
        %s439 = scalar_select %p438, %s34, 0
        %s440 = smul.addr %s439, 2
        %s441 = smul.addr %s437, 2
        %s442 = sadd.s32 %s440, %s441
        %s443 = smul.addr %s442, 8
        %s444 = scalar_lea.vmem %s6, %s443
        %p445 = pneg %p259
        %p446 = pneg %p256
        %p447 = scmp.lt.s32.totalorder %s33, 1
        %s448 = scalar_select %p447, %s33, 1
        %p449 = scmp.lt.s32.totalorder %s34, 0
        %s450 = scalar_select %p449, %s34, 0
        %s451 = smul.addr %s450, 2
        %s452 = smul.addr %s448, 2
        %s453 = sadd.s32 %s451, %s452
        %s454 = smul.addr %s453, 8
        %s455 = scalar_lea.vmem %s7, %s454
        %p456 = scmp.lt.s32.totalorder %s33, 1
        %s457 = scalar_select %p456, %s33, 1
        %s458 = smul.addr %s457, 2
        %s459 = smul.addr %s458, 4
        %s460 = scalar_lea.vmem %s1, %s459
        %s461 = sadd.s32 %s34, %s35
        %s462 = smul.u32 16, %s461
        %s463 = sadd.s32 %s34, %s35
        %p464 = scmp.lt.s32.totalorder %s33, 1
        %s465 = scalar_select %p464, %s33, 1
        %p466 = scmp.lt.s32.totalorder %s34, 0
        %s467 = scalar_select %p466, %s34, 0
        %s468 = smul.addr %s467, 2
        %s469 = smul.addr %s465, 2
        %s470 = sadd.s32 %s468, %s469
        %s471 = smul.addr %s470, 8
        %s472 = scalar_lea.vmem %s6, %s471
        %p473 = scmp.lt.s32.totalorder %s33, 1
        %s474 = scalar_select %p473, %s33, 1
        %p475 = scmp.lt.s32.totalorder %s34, 0
        %s476 = scalar_select %p475, %s34, 0
        %s477 = smul.addr %s476, 2
        %s478 = smul.addr %s474, 2
        %s479 = sadd.s32 %s477, %s478
        %s480 = smul.addr %s479, 8
        %s481 = scalar_lea.vmem %s7, %s480
        %p483 = scmp.eq.s32.totalorder %s35, 0
        // Predicated region
        $region53: #{tpu_custom_call.1} parent=39 // pred_check
          %p484 = pneg %p483
        $region54: #{tpu_custom_call.1} parent=39 // pred_check_branch
          %486 = sbr.rel (%p484) target = $region56
        $region55: #{tpu_custom_call.1} parent=39 // pred_region
          %vm487 = vcmask 7168
          %488 = vst.msk [vmem:[#allocation2] sm:$0xff] %vm487, -1e+30
          %489 = vst.msk [vmem:[#allocation2 + $0x8] sm:$0xff] %vm487, -1e+30
          %490 = vst.msk [vmem:[#allocation3] sm:$0xff] %vm487, 0.0
          %491 = vst.msk [vmem:[#allocation3 + $0x8] sm:$0xff] %vm487, 0.0
          %492 = vst [vmem:[#allocation4] sm:$0xff] 0.0
          %493 = vst [vmem:[#allocation4 + $0x8] sm:$0xff] 0.0
        $region56: #{tpu_custom_call.1} parent=39 // pred_fallthru
          _
        %v494 = vld [vmem:[%s460] sm:$0xf]
        %v495 = vld [vmem:[%s460 + $0x4] sm:$0xf]
        %v496 = vld [vmem:[%s371] sm:$0xf]
        %v497 = vld [vmem:[%s371 + $0x4] sm:$0xf]
        %v498 = vld [vmem:[%s381] sm:$0xf]
        %v499 = vld [vmem:[%s381 + $0x4] sm:$0xf]
        %v500 = vld [vmem:[%s381 + $0x8] sm:$0xf]
        %v501 = vld [vmem:[%s381 + $0xc] sm:$0xf]
        %v502 = vld [vmem:[%s381 + $0x10] sm:$0xf]
        %v503 = vld [vmem:[%s381 + $0x14] sm:$0xf]
        %v504 = vld [vmem:[%s381 + $0x18] sm:$0xf]
        %v505 = vld [vmem:[%s381 + $0x1c] sm:$0xf]
        %v506 = vld [vmem:[%s381 + $0x20] sm:$0xf]
        %v507 = vld [vmem:[%s381 + $0x24] sm:$0xf]
        %v508 = vld [vmem:[%s381 + $0x28] sm:$0xf]
        %v509 = vld [vmem:[%s381 + $0x2c] sm:$0xf]
        %v510 = vld [vmem:[%s381 + $0x30] sm:$0xf]
        %v511 = vld [vmem:[%s381 + $0x34] sm:$0xf]
        %v512 = vld [vmem:[%s381 + $0x38] sm:$0xf]
        %v513 = vld [vmem:[%s381 + $0x3c] sm:$0xf]
        %v514 = vld [vmem:[%s391] sm:$0xf]
        %v515 = vld [vmem:[%s391 + $0x4] sm:$0xf]
        %v518 = vunpack.c.l.b16 %v496
        %v519 = vunpack.c.l.b16 %v497
        %v520 = vpack.c.b16 %v519, %v518
        %v523 = vunpack.c.l.b16 %v514
        %v524 = vunpack.c.l.b16 %v515
        %v525 = vpack.c.b16 %v524, %v523
        %vm527 = vcmask 130048
        %v529 = vsel %vm527, %v520, 0
        %531 = vmatpush.bf16.msra.mxu0 0
        %532 = vmatpush.bf16.msra.mxu0 0
        %533 = vmatpush.bf16.msra.mxu0 0
        %534 = vmatpush.bf16.msra.mxu0 0
        %535 = vmatpush.bf16.msra.mxu0 0
        %536 = vmatpush.bf16.msra.mxu0 0
        %537 = vmatpush.bf16.msra.mxu0 0
        %538 = vmatpush.bf16.msra.mxu0 %v525
        %539 = vmatmul.bf16.gmra.mxu0 %v529
        %v540 = vpop.f32.mrf.mxu0
        %v541 = vadd.f32 0.0, %v540
        %v542 = vpop.f32.mrf.mxu0
        %v543 = vadd.f32 0.0, %v542
        %544 = vdwg.mxu0
        %v547 = vunpack.c.l.b16 %v494
        %v548 = vunpack.c.l.b16 %v495
        %v549 = vpack.c.b16 %v548, %v547
        %v567 = vunpack.c.l.b16 %v498
        %v568 = vunpack.c.l.b16 %v499
        %v569 = vunpack.c.l.b16 %v500
        %v570 = vunpack.c.l.b16 %v501
        %v571 = vunpack.c.l.b16 %v502
        %v572 = vunpack.c.l.b16 %v503
        %v573 = vunpack.c.l.b16 %v504
        %v574 = vunpack.c.l.b16 %v505
        %v575 = vunpack.c.l.b16 %v506
        %v576 = vunpack.c.l.b16 %v507
        %v577 = vunpack.c.l.b16 %v508
        %v578 = vunpack.c.l.b16 %v509
        %v579 = vunpack.c.l.b16 %v510
        %v580 = vunpack.c.l.b16 %v511
        %v581 = vunpack.c.l.b16 %v512
        %v582 = vunpack.c.l.b16 %v513
        %v583 = vpack.c.b16 %v568, %v567
        %v584 = vpack.c.b16 %v570, %v569
        %v585 = vpack.c.b16 %v572, %v571
        %v586 = vpack.c.b16 %v574, %v573
        %v587 = vpack.c.b16 %v576, %v575
        %v588 = vpack.c.b16 %v578, %v577
        %v589 = vpack.c.b16 %v580, %v579
        %v590 = vpack.c.b16 %v582, %v581
        %599 = vmatpush.bf16.xpose.msra.mxu0 %v590
        %600 = vmatpush.bf16.xpose.msra.mxu0 %v589
        %601 = vmatpush.bf16.xpose.msra.mxu0 %v588
        %602 = vmatpush.bf16.xpose.msra.mxu0 %v587
        %603 = vmatpush.bf16.xpose.msra.mxu0 %v586
        %604 = vmatpush.bf16.xpose.msra.mxu0 %v585
        %605 = vmatpush.bf16.xpose.msra.mxu0 %v584
        %606 = vmatpush.bf16.xpose.msra.mxu0 %v583
        %607 = vmatmul.bf16.gmra.mxu0 %v549
        %v608 = vpop.f32.mrf.mxu0
        %v609 = vadd.f32 %v541, %v608
        %v610 = vpop.f32.mrf.mxu0
        %v611 = vadd.f32 %v543, %v610
        %612 = vdwg.mxu0
        %v613 = vmul.f32 %v609, 0.14433756
        %v614 = vmul.f32 %v611, 0.14433756
        %s615 = sadd.s32 %s34, %s35
        %s616 = smul.u32 %s615, 128
        %s617 = sadd.s32 %s616, 127
        %p618 = scmp.gt.s32.totalorder %s617, 12
        %v619 = vld [vmem:[#allocation2] sm:$0xff]
        %v620 = vld [vmem:[#allocation2 + $0x8] sm:$0xff]
        // Predicated region
        $region57: #{tpu_custom_call.1} parent=39 // pred_check
          %p621 = pneg %p618
        $region58: #{tpu_custom_call.1} parent=39 // pred_check_branch
          %623 = sbr.rel (%p621) target = $region60
        $region59: #{tpu_custom_call.1} parent=39 // pred_region
          %v624 = vlaneseq
          %v625 = vand.u32 %v624, 127
          %v626 = vstv %s616
          %v627 = vadd.s32 %v626, %v625
          %v628 = vld [vmem:[%s0] sm:$0xff]
          %v629 = vld [vmem:[%s0 + $0x8] sm:$0xff]
          %630 = vset.pattern.permute.xlu0 0
          %631 = vperm.xlu0 %630, %v628
          %v632 = vpop.permute.xlu0 %631
          %633 = vset.pattern.permute.xlu0 0
          %634 = vperm.xlu0 %633, %v629
          %v635 = vpop.permute.xlu0 %634
          %vm636 = vcmp.le.s32.totalorder %v627, %v632
          %vm637 = vcmp.le.s32.totalorder %v627, %v635
          %v638 = vsel %vm636, %v613, -1e+30
          %v639 = vsel %vm637, %v614, -1e+30
          %640 = vmax.xlane.f32.xlu0 %v638
          %v641 = vpop.xlane.xlu0 %640
          %642 = vmax.xlane.f32.xlu0 %v639
          %v643 = vpop.xlane.xlu0 %642
          %v644 = vmax.f32 %v619, %v641
          %v645 = vmax.f32 %v620, %v643
          %v646 = vsub.f32 %v619, %v644
          %v647 = vsub.f32 %v620, %v645
          %v648 = vmul.f32 %v646, 1.442695
          %v649 = vpow.pop %v648
          %v650 = vmul.f32 %v647, 1.442695
          %v651 = vpow.pop %v650
          %653 = vset.pattern.permute.xlu0 0
          %654 = vperm.xlu0 %653, %v644
          %v655 = vpop.permute.xlu0 %654
          %658 = vset.pattern.permute.xlu0 0
          %659 = vperm.xlu0 %658, %v645
          %v660 = vpop.permute.xlu0 %659
          %v662 = vsub.f32 %v638, %v655
          %v663 = vsub.f32 %v639, %v660
          %v664 = vmul.f32 %v662, 1.442695
          %v665 = vpow.pop %v664
          %v666 = vmul.f32 %v663, 1.442695
          %v667 = vpow.pop %v666
          %v668 = vsel %vm636, %v665, 0.0
          %v669 = vsel %vm637, %v667, 0.0
          %v670 = vld [vmem:[#allocation3] sm:$0xff]
          %v671 = vld [vmem:[#allocation3 + $0x8] sm:$0xff]
          %v672 = vmul.f32 %v649, %v670
          %v673 = vmul.f32 %v651, %v671
          %674 = vadd.xlane.f32.xlu0 %v668
          %v675 = vpop.xlane.xlu0 %674
          %676 = vadd.xlane.f32.xlu0 %v669
          %v677 = vpop.xlane.xlu0 %676
          %v678 = vadd.f32 %v672, %v675
          %v679 = vadd.f32 %v673, %v677
          %vm680 = vcmask 7168
          %681 = vst.msk [vmem:[#allocation3] sm:$0xff] %vm680, %v678
          %682 = vst.msk [vmem:[#allocation3 + $0x8] sm:$0xff] %vm680, %v679
          %v683 = vld [vmem:[#allocation4] sm:$0xff]
          %v684 = vld [vmem:[#allocation4 + $0x8] sm:$0xff]
          %686 = vset.pattern.permute.xlu0 0
          %687 = vperm.xlu0 %686, %v649
          %v688 = vpop.permute.xlu0 %687
          %691 = vset.pattern.permute.xlu0 0
          %692 = vperm.xlu0 %691, %v651
          %v693 = vpop.permute.xlu0 %692
          %v695 = vmul.f32 %v688, %v683
          %v696 = vmul.f32 %v693, %v684
          %v697 = vpack.c.bf16 %v669, %v668
          %698 = vmatpush.bf16.msra.mxu0 %v590
          %699 = vmatpush.bf16.msra.mxu0 %v589
          %700 = vmatpush.bf16.msra.mxu0 %v588
          %701 = vmatpush.bf16.msra.mxu0 %v587
          %702 = vmatpush.bf16.msra.mxu0 %v586
          %703 = vmatpush.bf16.msra.mxu0 %v585
          %704 = vmatpush.bf16.msra.mxu0 %v584
          %705 = vmatpush.bf16.msra.mxu0 %v583
          %706 = vmatmul.bf16.gmra.mxu0 %v697
          %v707 = vpop.f32.mrf.mxu0
          %v708 = vadd.f32 0.0, %v707
          %v709 = vpop.f32.mrf.mxu0
          %v710 = vadd.f32 0.0, %v709
          %711 = vdwg.mxu0
          %v712 = vadd.f32 %v695, %v708
          %v713 = vadd.f32 %v696, %v710
          %714 = vst [vmem:[#allocation4] sm:$0xff] %v712
          %715 = vst [vmem:[#allocation4 + $0x8] sm:$0xff] %v713
          %716 = vst.msk [vmem:[#allocation2] sm:$0xff] %vm680, %v644
          %717 = vst.msk [vmem:[#allocation2 + $0x8] sm:$0xff] %vm680, %v645
        $region60: #{tpu_custom_call.1} parent=39 // pred_fallthru
          _
        %p718 = scmp.le.s32.totalorder %s617, 12
        // Predicated region
        $region61: #{tpu_custom_call.1} parent=39 // pred_check
          %p719 = pneg %p718
        $region62: #{tpu_custom_call.1} parent=39 // pred_check_branch
          %721 = sbr.rel (%p719) target = $region64
        $region63: #{tpu_custom_call.1} parent=39 // pred_region
          %722 = vmax.xlane.f32.xlu0 %v613
          %v723 = vpop.xlane.xlu0 %722
          %724 = vmax.xlane.f32.xlu0 %v614
          %v725 = vpop.xlane.xlu0 %724
          %v726 = vmax.f32 %v619, %v723
          %v727 = vmax.f32 %v620, %v725
          %v728 = vsub.f32 %v619, %v726
          %v729 = vsub.f32 %v620, %v727
          %v730 = vmul.f32 %v728, 1.442695
          %v731 = vpow.pop %v730
          %v732 = vmul.f32 %v729, 1.442695
          %v733 = vpow.pop %v732
          %735 = vset.pattern.permute.xlu0 0
          %736 = vperm.xlu0 %735, %v726
          %v737 = vpop.permute.xlu0 %736
          %740 = vset.pattern.permute.xlu0 0
          %741 = vperm.xlu0 %740, %v727
          %v742 = vpop.permute.xlu0 %741
          %v744 = vsub.f32 %v613, %v737
          %v745 = vsub.f32 %v614, %v742
          %v746 = vmul.f32 %v744, 1.442695
          %v747 = vpow.pop %v746
          %v748 = vmul.f32 %v745, 1.442695
          %v749 = vpow.pop %v748
          %v750 = vld [vmem:[#allocation3] sm:$0xff]
          %v751 = vld [vmem:[#allocation3 + $0x8] sm:$0xff]
          %v752 = vmul.f32 %v731, %v750
          %v753 = vmul.f32 %v733, %v751
          %754 = vadd.xlane.f32.xlu0 %v747
          %v755 = vpop.xlane.xlu0 %754
          %756 = vadd.xlane.f32.xlu0 %v749
          %v757 = vpop.xlane.xlu0 %756
          %v758 = vadd.f32 %v752, %v755
          %v759 = vadd.f32 %v753, %v757
          %vm760 = vcmask 7168
          %761 = vst.msk [vmem:[#allocation3] sm:$0xff] %vm760, %v758
          %762 = vst.msk [vmem:[#allocation3 + $0x8] sm:$0xff] %vm760, %v759
          %v763 = vld [vmem:[#allocation4] sm:$0xff]
          %v764 = vld [vmem:[#allocation4 + $0x8] sm:$0xff]
          %766 = vset.pattern.permute.xlu0 0
          %767 = vperm.xlu0 %766, %v731
          %v768 = vpop.permute.xlu0 %767
          %771 = vset.pattern.permute.xlu0 0
          %772 = vperm.xlu0 %771, %v733
          %v773 = vpop.permute.xlu0 %772
          %v775 = vmul.f32 %v768, %v763
          %v776 = vmul.f32 %v773, %v764
          %v777 = vpack.c.bf16 %v749, %v747
          %778 = vmatpush.bf16.msra.mxu0 %v590
          %779 = vmatpush.bf16.msra.mxu0 %v589
          %780 = vmatpush.bf16.msra.mxu0 %v588
          %781 = vmatpush.bf16.msra.mxu0 %v587
          %782 = vmatpush.bf16.msra.mxu0 %v586
          %783 = vmatpush.bf16.msra.mxu0 %v585
          %784 = vmatpush.bf16.msra.mxu0 %v584
          %785 = vmatpush.bf16.msra.mxu0 %v583
          %786 = vmatmul.bf16.gmra.mxu0 %v777
          %v787 = vpop.f32.mrf.mxu0
          %v788 = vadd.f32 0.0, %v787
          %v789 = vpop.f32.mrf.mxu0
          %v790 = vadd.f32 0.0, %v789
          %791 = vdwg.mxu0
          %v792 = vadd.f32 %v775, %v788
          %v793 = vadd.f32 %v776, %v790
          %794 = vst [vmem:[#allocation4] sm:$0xff] %v792
          %795 = vst [vmem:[#allocation4 + $0x8] sm:$0xff] %v793
          %796 = vst.msk [vmem:[#allocation2] sm:$0xff] %vm760, %v726
          %797 = vst.msk [vmem:[#allocation2 + $0x8] sm:$0xff] %vm760, %v727
        $region64: #{tpu_custom_call.1} parent=39 // pred_fallthru
          _
        // Predicated region
        $region65: #{tpu_custom_call.1} parent=39 // pred_check
          %p798 = pneg %p483
        $region66: #{tpu_custom_call.1} parent=39 // pred_check_branch
          %800 = sbr.rel (%p798) target = $region68
        $region67: #{tpu_custom_call.1} parent=39 // pred_region
          %v801 = vld [vmem:[#allocation4] sm:$0xff]
          %v802 = vld [vmem:[#allocation4 + $0x8] sm:$0xff]
          %803 = vst [vmem:[%s433] sm:$0xff] %v801
          %804 = vst [vmem:[%s433 + $0x8] sm:$0xff] %v802
          %v805 = vld [vmem:[#allocation2] sm:$0xff]
          %v806 = vld [vmem:[#allocation2 + $0x8] sm:$0xff]
          %vm807 = vcmask 7168
          %808 = vst.msk [vmem:[%s472] sm:$0xff] %vm807, %v805
          %809 = vst.msk [vmem:[%s472 + $0x8] sm:$0xff] %vm807, %v806
          %v810 = vld [vmem:[#allocation3] sm:$0xff]
          %v811 = vld [vmem:[#allocation3 + $0x8] sm:$0xff]
          %812 = vst.msk [vmem:[%s481] sm:$0xff] %vm807, %v810
          %813 = vst.msk [vmem:[%s481 + $0x8] sm:$0xff] %vm807, %v811
        $region68: #{tpu_custom_call.1} parent=39 // pred_fallthru
          _
        %s814 = sand.u32 %s190, 1
        %s815 = scalar_lea.sflag [#allocation7], %s814
        %s816 = sand.u32 %s190, 1
        %s817 = smul.addr %s816, 16
        %s818 = scalar_lea.vmem [#allocation11], %s817
        %p819 = scmp.lt.s32.totalorder %s33, 1
        %s820 = scalar_select %p819, %s33, 1
        %p821 = scmp.lt.s32.totalorder %s34, 0
        %s822 = scalar_select %p821, %s34, 0
        %s823 = smul.addr %s822, 2
        %s824 = smul.addr %s820, 2
        %s825 = sadd.s32 %s823, %s824
        %s826 = smul.addr %s825, 8
        %s827 = scalar_lea.vmem %s6, %s826
        %p828 = scmp.lt.s32.totalorder %s33, 1
        %s829 = scalar_select %p828, %s33, 1
        %p830 = scmp.lt.s32.totalorder %s34, 0
        %s831 = scalar_select %p830, %s34, 0
        %s832 = smul.addr %s831, 2
        %s833 = smul.addr %s829, 2
        %s834 = sadd.s32 %s832, %s833
        %s835 = smul.addr %s834, 8
        %s836 = scalar_lea.vmem %s7, %s835
        // Predicated region
        $region69: #{tpu_custom_call.1} parent=39 // pred_check
          %p837 = pneg %p200
        $region70: #{tpu_custom_call.1} parent=39 // pred_check_branch
          %839 = sbr.rel (%p837) target = $region72
        $region71: #{tpu_custom_call.1} parent=39 // pred_region
          %841 = vsyncadd %s815, 0
          %s842 = smul.addr %s34, 2
          %s843 = smul.addr %s33, 2
          %s844 = sadd.s32 %s842, %s843
          %s845 = smul.addr %s844, 8
          %s846 = scalar_lea.hbm %s5, %s845
          %s847 = sshll.u32 %s818, 4
          %s848 = int_to_ptr.vmem [resolvable:$true] %s847
          %s849 = sshll.u32 %s846, 4
          %s850 = int_to_ptr.hbm [resolvable:$true] %s849
          %855 = dma.vmem_to_hbm [thread:$0]  %s848, 256, %s850, %s815, 128, 128, 8
        $region72: #{tpu_custom_call.1} parent=39 // pred_fallthru
          _
        // Predicated region
        $region73: #{tpu_custom_call.1} parent=39 // pred_check
          %p856 = pneg %p228
        $region74: #{tpu_custom_call.1} parent=39 // pred_check_branch
          %858 = sbr.rel (%p856) target = $region76
        $region75: #{tpu_custom_call.1} parent=39 // pred_region
          _
        $region76: #{tpu_custom_call.1} parent=39 // pred_fallthru
          _
        // Predicated region
        $region77: #{tpu_custom_call.1} parent=39 // pred_check
          %p859 = pneg %p256
        $region78: #{tpu_custom_call.1} parent=39 // pred_check_branch
          %861 = sbr.rel (%p859) target = $region80
        $region79: #{tpu_custom_call.1} parent=39 // pred_region
          _
        $region80: #{tpu_custom_call.1} parent=39 // pred_fallthru
          _
      $region40: #{tpu_custom_call.1} parent=5 // pred_fallthru
        _
      %p862 = scmp.le.s32.totalorder 2, %s23
      // Predicated region
      $region81: #{tpu_custom_call.1} parent=5 // pred_check
        %p863 = pneg %p862
      $region82: #{tpu_custom_call.1} parent=5 // pred_check_branch
        %865 = sbr.rel (%p863) target = $region84
      $region83: #{tpu_custom_call.1} parent=5 // pred_region
        %s866 = ssub.s32 %s23, 2
        // Predicated region
        $region85: #{tpu_custom_call.1} parent=83 // pred_check
          %p867 = pneg %p206
        $region86: #{tpu_custom_call.1} parent=83 // pred_check_branch
          %869 = sbr.rel (%p867) target = $region88
        $region87: #{tpu_custom_call.1} parent=83 // pred_region
          %s870 = sand.u32 %s191, 1
          %s871 = scalar_lea.sflag [#allocation7], %s870
          %s872 = sand.u32 %s191, 1
          %s873 = smul.addr %s872, 16
          %s874 = scalar_lea.vmem [#allocation11], %s873
          %876 = dma.done %s871, 256
        $region88: #{tpu_custom_call.1} parent=83 // pred_fallthru
          _
        // Predicated region
        $region89: #{tpu_custom_call.1} parent=83 // pred_check
          %p877 = pneg %p234
        $region90: #{tpu_custom_call.1} parent=83 // pred_check_branch
          %879 = sbr.rel (%p877) target = $region92
        $region91: #{tpu_custom_call.1} parent=83 // pred_region
          %p880 = scmp.lt.s32.totalorder %s36, 1
          %s881 = scalar_select %p880, %s36, 1
          %p882 = scmp.lt.s32.totalorder %s37, 0
          %s883 = scalar_select %p882, %s37, 0
          %s884 = smul.addr %s883, 2
          %s885 = smul.addr %s881, 2
          %s886 = sadd.s32 %s884, %s885
          %s887 = smul.addr %s886, 8
          %s888 = scalar_lea.vmem %s6, %s887
        $region92: #{tpu_custom_call.1} parent=83 // pred_fallthru
          _
        // Predicated region
        $region93: #{tpu_custom_call.1} parent=83 // pred_check
          %p889 = pneg %p262
        $region94: #{tpu_custom_call.1} parent=83 // pred_check_branch
          %891 = sbr.rel (%p889) target = $region96
        $region95: #{tpu_custom_call.1} parent=83 // pred_region
          %p892 = scmp.lt.s32.totalorder %s36, 1
          %s893 = scalar_select %p892, %s36, 1
          %p894 = scmp.lt.s32.totalorder %s37, 0
          %s895 = scalar_select %p894, %s37, 0
          %s896 = smul.addr %s895, 2
          %s897 = smul.addr %s893, 2
          %s898 = sadd.s32 %s896, %s897
          %s899 = smul.addr %s898, 8
          %s900 = scalar_lea.vmem %s7, %s899
        $region96: #{tpu_custom_call.1} parent=83 // pred_fallthru
          _
      $region84: #{tpu_custom_call.1} parent=5 // pred_fallthru
        _
    $region6: #{tpu_custom_call.1} parent=1 // loop_footer
      %s27 = sadd.s32 1, %s23
    $region7: #{tpu_custom_call.1} parent=1 // loop_footer_branch
      %22 = sbr.rel target = $region3
    $region8: #{tpu_custom_call.1} parent=1 // loop_exit
      _
    %901 = vsyncpa [#allocation6], 1
    %s902 = scalar_lea.sflag [#allocation6], 1
    %903 = vsyncpa %s902, 1
    %904 = vsyncpa [#allocation9], 1
    %s905 = scalar_lea.sflag [#allocation9], 1
    %906 = vsyncpa %s905, 1
    %907 = vsyncpa [#allocation7], 1
    %s908 = scalar_lea.sflag [#allocation7], 1
    %909 = vsyncpa %s908, 1

</llo_original>
